<compile_context>
chip_gen: v7x
topology: tpu7x:2x2x1
jax: 0.10.0
libtpu: 0.0.40
codegen_flags: <defaults>
</compile_context>

<pallas_src>
import functools

import jax
import jax.numpy as jnp
from jax.experimental import pallas as pl
from jax.experimental.pallas import tpu as pltpu


# ----------------------------------------------------------------------------- #
# Pallas kernel: fused multi-level average pooling along time.
# ----------------------------------------------------------------------------- #
def _fused_pool_kernel(x_ref, *out_refs, window):
    """x_ref: (1, TILE_T, C). out_refs[i]: (1, TILE_T // window**(i+1), C).

    Level i+1 is computed from the *stored* level-i output (same as PyTorch, which
    feeds each pooled tensor back through AvgPool1d in the tensor dtype).
    """
    inv_w = 1.0 / float(window)
    src = x_ref
    for o_ref in out_refs:
        To = o_ref.shape[1]
        # Strided-sublane accumulation: no reshape, no full-tile f32 copy.
        acc = src[:, pl.ds(0, To, stride=window), :].astype(jnp.float32)
        for k in range(1, window):
            acc = acc + src[:, pl.ds(k, To, stride=window), :].astype(jnp.float32)
        o_ref[...] = (acc * inv_w).astype(o_ref.dtype)
        src = o_ref  # next level pools the level just written (still in VMEM)


def _fused_pool_pallas(x, window, layers, n_tiles):
    B, T, C = x.shape
    tile_t = T // n_tiles

    out_shapes, out_specs = [], []
    t_i, tile_i = T, tile_t
    for _ in range(layers):
        t_i //= window
        tile_i //= window
        out_shapes.append(jax.ShapeDtypeStruct((B, t_i, C), x.dtype))
        out_specs.append(pl.BlockSpec((1, tile_i, C), lambda b, t: (b, t, 0)))

    kernel = functools.partial(_fused_pool_kernel, window=window)
    outs = pl.pallas_call(
        kernel,
        out_shape=tuple(out_shapes),
        grid=(B, n_tiles),
        in_specs=[pl.BlockSpec((1, tile_t, C), lambda b, t: (b, t, 0))],
        out_specs=tuple(out_specs),
        compiler_params=pltpu.CompilerParams(
            dimension_semantics=("parallel", "parallel")
        ),
    )(x)
    return list(outs)


# ----------------------------------------------------------------------------- #
# Tiling / dispatch helpers (padded-VMEM-aware).
# ----------------------------------------------------------------------------- #
_ABS_SAFE_CAP_BYTES = 12 << 20  # stays under v5e's 16 MiB default scoped VMEM


def _round_up(x, m):
    return ((x + m - 1) // m) * m


def _sublane_multiple(dtype):
    # VMEM sublane tiling: 8 for 32-bit, 16 for 16-bit, 32 for 8-bit dtypes.
    return {4: 8, 2: 16, 1: 32}.get(jnp.dtype(dtype).itemsize, 8)


def _block_vmem_bytes(tile_t, C, window, layers, dtype):
    """Padded VMEM footprint of one grid step: input block + all output blocks,
    x2 for the double-buffered Pallas pipeline."""
    sub = _sublane_multiple(dtype)
    itemsize = jnp.dtype(dtype).itemsize
    lanes = _round_up(max(C, 1), 128)
    total = _round_up(tile_t, sub) * lanes * itemsize
    rows = tile_t
    for _ in range(layers):
        rows //= window
        total += _round_up(max(rows, 1), sub) * lanes * itemsize
    return 2 * total


def _choose_num_tiles(T, window, layers, C, dtype, budget_bytes):
    """Number of time tiles per sequence.

    TILE_T = (TL // n) * window**layers with TL = T // window**layers.  Every
    level's output block sublane dim must be a multiple of the dtype sublane
    tile unless n == 1 (full-extent blocks are always legal).  Returns the
    smallest n (largest tile) whose padded footprint fits `budget_bytes`; if
    none fits, the largest legal n if it fits the absolute safety cap; else
    None (caller falls back to plain XLA)."""
    w_pow_l = window ** layers
    TL = T // w_pow_l
    sub = _sublane_multiple(dtype)

    candidates = []
    for n in range(1, TL + 1):
        if TL % n:
            continue
        if n != 1 and (TL // n) % sub != 0:
            continue
        candidates.append(n)
    if not candidates:
        return None

    for n in candidates:  # ascending n == descending tile size
        tile_t = (TL // n) * w_pow_l
        if _block_vmem_bytes(tile_t, C, window, layers, dtype) <= budget_bytes:
            return n

    n = candidates[-1]  # smallest legal tile
    tile_t = (TL // n) * w_pow_l
    if _block_vmem_bytes(tile_t, C, window, layers, dtype) <= _ABS_SAFE_CAP_BYTES:
        return n
    return None


def _avg_pool_time_jnp(x, window):
    """Plain-XLA AvgPool1d(kernel=stride=window) over time: [B,T,C] -> [B,T//w,C]."""
    B, T, C = x.shape
    dtype = x.dtype
    To = T // window
    xw = x[:, : To * window, :].reshape(B, To, window, C)
    return jnp.mean(xw.astype(jnp.float32), axis=2).astype(dtype)


def avg_pool_levels(x, window, layers, *, use_pallas=None,
                    vmem_budget_bytes=10 << 20):
    """Return [level1, ..., levelL] pooled tensors (level0 == x is not included)."""
    B, T, C = x.shape
    itemsize = jnp.dtype(x.dtype).itemsize
    w_pow_l = max(window, 1) ** layers

    pallas_ok = (layers > 0) and (window >= 1) and (T > 0) and (T % w_pow_l == 0)
    if use_pallas is None:
        # Tiny problems: a fused XLA reshape+reduce beats per-grid-step overhead.
        use_pallas = pallas_ok and (B * T * C * itemsize >= (1 << 20))
    use_pallas = bool(use_pallas) and pallas_ok

    if use_pallas:
        n_tiles = _choose_num_tiles(T, window, layers, C, x.dtype,
                                    vmem_budget_bytes)
        if n_tiles is not None:
            return _fused_pool_pallas(x, window, layers, n_tiles)

    # Fallback: ragged T (partial windows dropped per level), tiny inputs, or
    # shapes that cannot be tiled within the VMEM budget.
    outs = []
    cur = x
    for _ in range(layers):
        cur = _avg_pool_time_jnp(cur, window)
        outs.append(cur)
    return outs


# ----------------------------------------------------------------------------- #
# Down_sample forward.
# ----------------------------------------------------------------------------- #
def down_sample(x_enc, x_mark_enc, *, down_sampling_window, down_sampling_layers,
                use_pallas=None, vmem_budget_bytes=10 << 20):
    """x_enc: [B, T, C]; x_mark_enc: [B, T, M] or None.

    Returns (list of [B, T_i, C], list of [B, T_i, M] or None), matching PyTorch.
    """
    x_enc_sampling_list = [x_enc] + avg_pool_levels(
        x_enc, down_sampling_window, down_sampling_layers,
        use_pallas=use_pallas, vmem_budget_bytes=vmem_budget_bytes,
    )

    if x_mark_enc is None:
        return x_enc_sampling_list, None

    # Strided time slice of the tiny mark tensor: pure indexing glue, left to XLA.
    x_mark_sampling_list = [x_mark_enc]
    cur = x_mark_enc
    for _ in range(down_sampling_layers):
        cur = cur[:, ::down_sampling_window, :]
        x_mark_sampling_list.append(cur)
    return x_enc_sampling_list, x_mark_sampling_list


# ----------------------------------------------------------------------------- #
# Self-test.
# ----------------------------------------------------------------------------- #
def _ref_levels(x, window, layers):
    B, T, C = x.shape
    outs, cur = [], x
    for _ in range(layers):
        To = cur.shape[1] // window
        cur = cur[:, : To * window, :].reshape(B, To, window, C).mean(axis=2)
        outs.append(cur)
    return outs


if __name__ == "__main__":
    window, layers = 2, 3
    B, T, C, M = 2, 1024, 8, 4

    key = jax.random.PRNGKey(0)
    k1, k2, k3 = jax.random.split(key, 3)
    x_enc = jax.random.normal(k1, (B, T, C), dtype=jnp.float32)
    x_mark_enc = jax.random.normal(k2, (B, T, M), dtype=jnp.float32)

    # Force the Pallas path (auto-dispatch would route this small test to XLA) and
    # force a multi-tile grid with a tiny budget to exercise tiling / index maps.
    xs, marks = down_sample(
        x_enc, x_mark_enc,
        down_sampling_window=window,
        down_sampling_layers=layers,
        use_pallas=True,
        vmem_budget_bytes=4096,
    )
    jax.block_until_ready(xs)
    jax.block_until_ready(marks)

    assert len(xs) == layers + 1 and len(marks) == layers + 1
    assert jnp.array_equal(xs[0], x_enc)
    assert jnp.array_equal(marks[0], x_mark_enc)
    refs = _ref_levels(x_enc, window, layers)
    ref_mark = x_mark_enc
    for i in range(1, layers + 1):
        ref_mark = ref_mark[:, ::window, :]
        assert xs[i].shape == refs[i - 1].shape, f"enc level {i} shape mismatch"
        assert jnp.allclose(xs[i], refs[i - 1], atol=1e-5, rtol=1e-5), \
            f"enc level {i} mismatch"
        assert jnp.array_equal(marks[i], ref_mark), f"mark level {i} mismatch"

    # Auto-dispatch path (tiny input -> plain XLA) must agree with the kernel path.
    xs_auto, _ = down_sample(
        x_enc, x_mark_enc,
        down_sampling_window=window,
        down_sampling_layers=layers,
    )
    for a, b in zip(xs, xs_auto):
        assert jnp.allclose(a, b, atol=1e-5, rtol=1e-5)

    # Larger case: exercises the auto-Pallas path and the padded-VMEM tile chooser.
    Bb, Tb, Cb = 8, 8192, 8
    x_big = jax.random.normal(k3, (Bb, Tb, Cb), dtype=jnp.float32)
    xs_big, _ = down_sample(
        x_big, None, down_sampling_window=window, down_sampling_layers=layers
    )
    jax.block_until_ready(xs_big)
    refs_big = _ref_levels(x_big, window, layers)
    for i in range(1, layers + 1):
        assert jnp.allclose(xs_big[i], refs_big[i - 1], atol=1e-5, rtol=1e-5), \
            f"big enc level {i} mismatch"

    # Ragged T exercises the fallback (trailing partial windows dropped per level).
    x_odd = jax.random.normal(key, (B, 50, C), dtype=jnp.float32)
    xs_odd, marks_odd = down_sample(
        x_odd, None, down_sampling_window=2, down_sampling_layers=2
    )
    assert [a.shape[1] for a in xs_odd] == [50, 25, 12]
    assert marks_odd is None
    jax.block_until_ready(xs_odd)

    print("KERNEL_OK")
</pallas_src>

<mosaic_0001>
module attributes {stable_mosaic.version = 11 : i64} {
  func.func @_fused_pool_kernel(%arg0: i32, %arg1: i32, %arg2: memref<1x64x8xf32, #tpu.memory_space<vmem>>, %arg3: memref<1x32x8xf32, #tpu.memory_space<vmem>>, %arg4: memref<1x16x8xf32, #tpu.memory_space<vmem>>, %arg5: memref<1x8x8xf32, #tpu.memory_space<vmem>>) attributes {dimension_semantics = [#tpu.dimension_semantics<parallel>, #tpu.dimension_semantics<parallel>], iteration_bounds = array<i64: 2, 16>, scalar_prefetch = 0 : i64, scratch_operands = 0 : i64, tpu.core_type = #tpu.core_type<tc>, window_params = [{transform_indices = @transform_0, window_bounds = array<i64: 1, 64, 8>}, {transform_indices = @transform_1, window_bounds = array<i64: 1, 32, 8>}, {transform_indices = @transform_2, window_bounds = array<i64: 1, 16, 8>}, {transform_indices = @transform_3, window_bounds = array<i64: 1, 8, 8>}]} {
    %c0 = arith.constant 0 : index
    %c0_0 = arith.constant 0 : index
    %c0_1 = arith.constant 0 : index
    %0 = tpu.strided_load %arg2[%c0, %c0_0, %c0_1] {strides = array<i32: 1, 2, 1>} : memref<1x64x8xf32, #tpu.memory_space<vmem>>, vector<1x32x8xf32>
    %c0_2 = arith.constant 0 : index
    %c1 = arith.constant 1 : index
    %c0_3 = arith.constant 0 : index
    %1 = tpu.strided_load %arg2[%c0_2, %c1, %c0_3] {strides = array<i32: 1, 2, 1>} : memref<1x64x8xf32, #tpu.memory_space<vmem>>, vector<1x32x8xf32>
    %2 = arith.addf %0, %1 : vector<1x32x8xf32>
    %cst = arith.constant 5.000000e-01 : f32
    %3 = vector.broadcast %cst : f32 to vector<1x32x8xf32>
    %4 = arith.mulf %2, %3 : vector<1x32x8xf32>
    %c0_4 = arith.constant 0 : index
    %c0_5 = arith.constant 0 : index
    %c0_6 = arith.constant 0 : index
    %5 = vector.load %arg3[%c0_4, %c0_5, %c0_6] : memref<1x32x8xf32, #tpu.memory_space<vmem>>, vector<1x32x8xf32>
    tpu.vector_store %arg3[%c0_4, %c0_5, %c0_6], %4 {strides = array<i32>} : memref<1x32x8xf32, #tpu.memory_space<vmem>>, vector<1x32x8xf32>,
    %c0_7 = arith.constant 0 : index
    %c0_8 = arith.constant 0 : index
    %c0_9 = arith.constant 0 : index
    %6 = tpu.strided_load %arg3[%c0_7, %c0_8, %c0_9] {strides = array<i32: 1, 2, 1>} : memref<1x32x8xf32, #tpu.memory_space<vmem>>, vector<1x16x8xf32>
    %c0_10 = arith.constant 0 : index
    %c1_11 = arith.constant 1 : index
    %c0_12 = arith.constant 0 : index
    %7 = tpu.strided_load %arg3[%c0_10, %c1_11, %c0_12] {strides = array<i32: 1, 2, 1>} : memref<1x32x8xf32, #tpu.memory_space<vmem>>, vector<1x16x8xf32>
    %8 = arith.addf %6, %7 : vector<1x16x8xf32>
    %cst_13 = arith.constant 5.000000e-01 : f32
    %9 = vector.broadcast %cst_13 : f32 to vector<1x16x8xf32>
    %10 = arith.mulf %8, %9 : vector<1x16x8xf32>
    %c0_14 = arith.constant 0 : index
    %c0_15 = arith.constant 0 : index
    %c0_16 = arith.constant 0 : index
    %11 = vector.load %arg4[%c0_14, %c0_15, %c0_16] : memref<1x16x8xf32, #tpu.memory_space<vmem>>, vector<1x16x8xf32>
    tpu.vector_store %arg4[%c0_14, %c0_15, %c0_16], %10 {strides = array<i32>} : memref<1x16x8xf32, #tpu.memory_space<vmem>>, vector<1x16x8xf32>,
    %c0_17 = arith.constant 0 : index
    %c0_18 = arith.constant 0 : index
    %c0_19 = arith.constant 0 : index
    %12 = tpu.strided_load %arg4[%c0_17, %c0_18, %c0_19] {strides = array<i32: 1, 2, 1>} : memref<1x16x8xf32, #tpu.memory_space<vmem>>, vector<1x8x8xf32>
    %c0_20 = arith.constant 0 : index
    %c1_21 = arith.constant 1 : index
    %c0_22 = arith.constant 0 : index
    %13 = tpu.strided_load %arg4[%c0_20, %c1_21, %c0_22] {strides = array<i32: 1, 2, 1>} : memref<1x16x8xf32, #tpu.memory_space<vmem>>, vector<1x8x8xf32>
    %14 = arith.addf %12, %13 : vector<1x8x8xf32>
    %cst_23 = arith.constant 5.000000e-01 : f32
    %15 = vector.broadcast %cst_23 : f32 to vector<1x8x8xf32>
    %16 = arith.mulf %14, %15 : vector<1x8x8xf32>
    %c0_24 = arith.constant 0 : index
    %c0_25 = arith.constant 0 : index
    %c0_26 = arith.constant 0 : index
    %17 = vector.load %arg5[%c0_24, %c0_25, %c0_26] : memref<1x8x8xf32, #tpu.memory_space<vmem>>, vector<1x8x8xf32>
    tpu.vector_store %arg5[%c0_24, %c0_25, %c0_26], %16 {strides = array<i32>} : memref<1x8x8xf32, #tpu.memory_space<vmem>>, vector<1x8x8xf32>,
    return
  }
  func.func @transform_0(%arg0: i32, %arg1: i32) -> (i32, i32, i32) {
    %c0_i32 = arith.constant 0 : i32
    %c0_i32_0 = arith.constant 0 : i32
    return %arg0, %arg1, %c0_i32 : i32, i32, i32
  }
  func.func @transform_1(%arg0: i32, %arg1: i32) -> (i32, i32, i32) {
    %c0_i32 = arith.constant 0 : i32
    %c0_i32_0 = arith.constant 0 : i32
    return %arg0, %arg1, %c0_i32 : i32, i32, i32
  }
  func.func @transform_2(%arg0: i32, %arg1: i32) -> (i32, i32, i32) {
    %c0_i32 = arith.constant 0 : i32
    %c0_i32_0 = arith.constant 0 : i32
    return %arg0, %arg1, %c0_i32 : i32, i32, i32
  }
  func.func @transform_3(%arg0: i32, %arg1: i32) -> (i32, i32, i32) {
    %c0_i32 = arith.constant 0 : i32
    %c0_i32_0 = arith.constant 0 : i32
    return %arg0, %arg1, %c0_i32 : i32, i32, i32
  }
}

</mosaic_0001>

<llo_original>
// kernel: tpu_custom_call.1
$region0: #{tpu_custom_call.1}
  #allocation0 [shape = 'u32[]', space=smem, size = 0x4, offset = 0x4, fixed_abs, tag = 'smem constant byte address 0x4 - core index']
  #allocation1 [shape = 'u32[144,128]{1,0:T(1,128)}', space=vmem, size = 0x12000, scoped, tag = 'internal scratch']
  %s0 = inlined_call_operand.vmem [shape: f32[2,1024,8], index: 0, kind: input, shape index: {}]
  %s1 = inlined_call_operand.vmem [shape: f32[2,512,8], index: 1, kind: output, shape index: {0}]
  %s2 = inlined_call_operand.vmem [shape: f32[2,256,8], index: 2, kind: output, shape index: {1}]
  %s3 = inlined_call_operand.vmem [shape: f32[2,128,8], index: 3, kind: output, shape index: {2}]
  %4 = xla_tuple %s1, %s2, %s3
  %s5 = sld [smem:[#allocation0]]
  $region53: #{tpu_custom_call.1} parent=0
    _
  %s7 = ssub.s32 1, %s5
  %s8 = scalar_select 0, %s7, %s5
  loop: start=0, step=1, limit=34
  $region2: #{tpu_custom_call.1} parent=0 // loop_pre_header
    _
  $region3: #{tpu_custom_call.1} parent=0 // loop_header
    %s10 = sphi 0, %s14
    %p11 = scmp.ge.s32.totalorder %s10, 34
    %s17 = sphi 0, %s29
    %s18 = sphi 0, %s25
    %s19 = sphi 0, %s17
    %s20 = sphi 0, %s18
    %s21 = sphi 0, %s19
    %s22 = sphi 0, %s20
    %s34 = sphi 0, %s36
    %s37 = sphi 0, %s34
    %s38 = sphi 0, %s37
    %s54 = sphi 0, %s38
    %s62 = sphi 0, %s64
    %s65 = sphi 0, %s62
    %s66 = sphi 0, %s65
    %s82 = sphi 0, %s66
    %s90 = sphi 0, %s92
    %s93 = sphi 0, %s90
    %s94 = sphi 0, %s93
    %s110 = sphi 0, %s94
    %s118 = sphi 0, %s120
    %s121 = sphi 0, %s118
    %s122 = sphi 0, %s121
    %s138 = sphi 0, %s122
  $region4: #{tpu_custom_call.1} parent=0 // loop_header_branch
    %13 = sbr.rel (%p11) target = $region8
  $region5: #{tpu_custom_call.1} parent=0 // loop_body
    %s15 = ssub.s32 %s10, 1
    %s16 = ssub.s32 %s10, 2
    %s23 = sadd.s32 1, %s18
    %p24 = scmp.ge.s32.totalorder %s23, 16
    %s25 = scalar_select %p24, 0, %s23
    %s26 = sadd.s32 1, %s17
    %s27 = scalar_select %p24, %s26, %s17
    %p28 = scmp.ge.s32.totalorder %s27, 2
    %s29 = scalar_select %p28, 0, %s27
    %s30 = ssub.s32 %s17, %s29
    %s31 = ssub.s32 %s18, %s25
    %s32 = sor.u32 %s30, %s31
    %p33 = scmp.eq.s32.totalorder %s32, 0
    %s35 = sadd.s32 %s34, 1
    %s36 = scalar_select %p33, %s34, %s35
    %p39 = pneg %p33
    %p40 = scmp.eq.s32.totalorder %s10, 31
    %p41 = por %p39, %p40
    %p42 = scmp.ne.s32.totalorder %s34, %s37
    %p43 = scmp.eq.s32.totalorder %s10, 0
    %p44 = por %p42, %p43
    %p45 = scmp.ne.s32.totalorder %s34, %s37
    %p46 = scmp.eq.s32.totalorder %s15, 31
    %p47 = por %p45, %p46
    %p48 = scmp.ne.s32.totalorder %s37, %s38
    %p49 = scmp.eq.s32.totalorder %s15, 0
    %p50 = por %p48, %p49
    %p51 = scmp.ne.s32.totalorder %s37, %s38
    %p52 = scmp.eq.s32.totalorder %s16, 31
    %p53 = por %p51, %p52
    %p55 = scmp.ne.s32.totalorder %s38, %s54
    %p56 = scmp.eq.s32.totalorder %s16, 0
    %p57 = por %p55, %p56
    %s58 = ssub.s32 %s17, %s29
    %s59 = ssub.s32 %s18, %s25
    %s60 = sor.u32 %s58, %s59
    %p61 = scmp.eq.s32.totalorder %s60, 0
    %s63 = sadd.s32 %s62, 1
    %s64 = scalar_select %p61, %s62, %s63
    %p67 = pneg %p61
    %p68 = scmp.eq.s32.totalorder %s10, 31
    %p69 = por %p67, %p68
    %p70 = scmp.ne.s32.totalorder %s62, %s65
    %p71 = scmp.eq.s32.totalorder %s10, 0
    %p72 = por %p70, %p71
    %p73 = scmp.ne.s32.totalorder %s62, %s65
    %p74 = scmp.eq.s32.totalorder %s15, 31
    %p75 = por %p73, %p74
    %p76 = scmp.ne.s32.totalorder %s65, %s66
    %p77 = scmp.eq.s32.totalorder %s15, 0
    %p78 = por %p76, %p77
    %p79 = scmp.ne.s32.totalorder %s65, %s66
    %p80 = scmp.eq.s32.totalorder %s16, 31
    %p81 = por %p79, %p80
    %p83 = scmp.ne.s32.totalorder %s66, %s82
    %p84 = scmp.eq.s32.totalorder %s16, 0
    %p85 = por %p83, %p84
    %s86 = ssub.s32 %s17, %s29
    %s87 = ssub.s32 %s18, %s25
    %s88 = sor.u32 %s86, %s87
    %p89 = scmp.eq.s32.totalorder %s88, 0
    %s91 = sadd.s32 %s90, 1
    %s92 = scalar_select %p89, %s90, %s91
    %p95 = pneg %p89
    %p96 = scmp.eq.s32.totalorder %s10, 31
    %p97 = por %p95, %p96
    %p98 = scmp.ne.s32.totalorder %s90, %s93
    %p99 = scmp.eq.s32.totalorder %s10, 0
    %p100 = por %p98, %p99
    %p101 = scmp.ne.s32.totalorder %s90, %s93
    %p102 = scmp.eq.s32.totalorder %s15, 31
    %p103 = por %p101, %p102
    %p104 = scmp.ne.s32.totalorder %s93, %s94
    %p105 = scmp.eq.s32.totalorder %s15, 0
    %p106 = por %p104, %p105
    %p107 = scmp.ne.s32.totalorder %s93, %s94
    %p108 = scmp.eq.s32.totalorder %s16, 31
    %p109 = por %p107, %p108
    %p111 = scmp.ne.s32.totalorder %s94, %s110
    %p112 = scmp.eq.s32.totalorder %s16, 0
    %p113 = por %p111, %p112
    %s114 = ssub.s32 %s17, %s29
    %s115 = ssub.s32 %s18, %s25
    %s116 = sor.u32 %s114, %s115
    %p117 = scmp.eq.s32.totalorder %s116, 0
    %s119 = sadd.s32 %s118, 1
    %s120 = scalar_select %p117, %s118, %s119
    %p123 = pneg %p117
    %p124 = scmp.eq.s32.totalorder %s10, 31
    %p125 = por %p123, %p124
    %p126 = scmp.ne.s32.totalorder %s118, %s121
    %p127 = scmp.eq.s32.totalorder %s10, 0
    %p128 = por %p126, %p127
    %p129 = scmp.ne.s32.totalorder %s118, %s121
    %p130 = scmp.eq.s32.totalorder %s15, 31
    %p131 = por %p129, %p130
    %p132 = scmp.ne.s32.totalorder %s121, %s122
    %p133 = scmp.eq.s32.totalorder %s15, 0
    %p134 = por %p132, %p133
    %p135 = scmp.ne.s32.totalorder %s121, %s122
    %p136 = scmp.eq.s32.totalorder %s16, 31
    %p137 = por %p135, %p136
    %p139 = scmp.ne.s32.totalorder %s122, %s138
    %p140 = scmp.eq.s32.totalorder %s16, 0
    %p141 = por %p139, %p140
    %p142 = scmp.le.s32.totalorder 1, %s10
    %p143 = scmp.lt.s32.totalorder %s10, 33
    %p144 = pnand %p142, %p143
    %p145 = pneg %p144
    // Predicated region
    $region9: #{tpu_custom_call.1} parent=5 // pred_check
      _
    $region10: #{tpu_custom_call.1} parent=5 // pred_check_branch
      %147 = sbr.rel (%p144) target = $region12
    $region11: #{tpu_custom_call.1} parent=5 // pred_region
      %s148 = ssub.s32 %s10, 1
    $region12: #{tpu_custom_call.1} parent=5 // pred_fallthru
      _
    %p149 = scmp.lt.s32.totalorder %s10, 32
    // Predicated region
    $region13: #{tpu_custom_call.1} parent=5 // pred_check
      %p150 = pneg %p149
    $region14: #{tpu_custom_call.1} parent=5 // pred_check_branch
      %152 = sbr.rel (%p150) target = $region16
    $region15: #{tpu_custom_call.1} parent=5 // pred_region
      // Predicated region
      $region17: #{tpu_custom_call.1} parent=15 // pred_check
        %p153 = pneg %p44
      $region18: #{tpu_custom_call.1} parent=15 // pred_check_branch
        %155 = sbr.rel (%p153) target = $region20
      $region19: #{tpu_custom_call.1} parent=15 // pred_region
        %s156 = smul.u32 8, %s18
        %p157 = scmp.lt.s32.totalorder %s17, 1
        %s158 = scalar_select %p157, %s17, 1
        %p159 = scmp.lt.s32.totalorder %s156, 127
        %s160 = scalar_select %p159, %s156, 127
        %s161 = smul.addr %s158, 128
        %s162 = sadd.s32 %s160, %s161
        %s163 = smul.addr %s162, 8
        %s164 = scalar_lea.vmem %s0, %s163
        %s165 = smul.u32 8, %s18
      $region20: #{tpu_custom_call.1} parent=15 // pred_fallthru
        _
    $region16: #{tpu_custom_call.1} parent=5 // pred_fallthru
      _
    %p166 = scmp.le.s32.totalorder 1, %s10
    %p167 = scmp.lt.s32.totalorder %s10, 33
    %p168 = pnand %p166, %p167
    %p169 = pneg %p168
    // Predicated region
    $region21: #{tpu_custom_call.1} parent=5 // pred_check
      _
    $region22: #{tpu_custom_call.1} parent=5 // pred_check_branch
      %171 = sbr.rel (%p168) target = $region24
    $region23: #{tpu_custom_call.1} parent=5 // pred_region
      %s172 = ssub.s32 %s10, 1
      %s173 = smul.u32 8, %s20
      %p174 = scmp.lt.s32.totalorder %s19, 1
      %s175 = scalar_select %p174, %s19, 1
      %p176 = scmp.lt.s32.totalorder %s173, 127
      %s177 = scalar_select %p176, %s173, 127
      %s178 = smul.addr %s175, 128
      %s179 = sadd.s32 %s177, %s178
      %s180 = smul.addr %s179, 8
      %s181 = scalar_lea.vmem %s0, %s180
      %p182 = pneg %p50
      %p183 = pneg %p47
      %p184 = pneg %p78
      %p185 = pneg %p75
      %s186 = smul.u32 4, %s20
      %p187 = scmp.lt.s32.totalorder %s19, 1
      %s188 = scalar_select %p187, %s19, 1
      %p189 = scmp.lt.s32.totalorder %s186, 63
      %s190 = scalar_select %p189, %s186, 63
      %s191 = smul.addr %s188, 64
      %s192 = sadd.s32 %s190, %s191
      %s193 = smul.addr %s192, 8
      %s194 = scalar_lea.vmem %s1, %s193
      %p195 = pneg %p106
      %p196 = pneg %p103
      %s197 = smul.u32 2, %s20
      %p198 = scmp.lt.s32.totalorder %s19, 1
      %s199 = scalar_select %p198, %s19, 1
      %p200 = scmp.lt.s32.totalorder %s197, 31
      %s201 = scalar_select %p200, %s197, 31
      %s202 = smul.addr %s199, 32
      %s203 = sadd.s32 %s201, %s202
      %s204 = smul.addr %s203, 8
      %s205 = scalar_lea.vmem %s2, %s204
      %p206 = pneg %p134
      %p207 = pneg %p131
      %p208 = scmp.lt.s32.totalorder %s19, 1
      %s209 = scalar_select %p208, %s19, 1
      %p210 = scmp.lt.s32.totalorder %s20, 15
      %s211 = scalar_select %p210, %s20, 15
      %s212 = smul.addr %s209, 16
      %s213 = sadd.s32 %s211, %s212
      %s214 = smul.addr %s213, 8
      %s215 = scalar_lea.vmem %s3, %s214
      %s216 = smul.u32 8, %s20
      %p217 = scmp.lt.s32.totalorder %s19, 1
      %s218 = scalar_select %p217, %s19, 1
      %p219 = scmp.lt.s32.totalorder %s216, 127
      %s220 = scalar_select %p219, %s216, 127
      %s221 = smul.addr %s218, 128
      %s222 = sadd.s32 %s220, %s221
      %s223 = smul.addr %s222, 8
      %s224 = scalar_lea.vmem %s0, %s223
      %s225 = smul.u32 8, %s20
      %s226 = smul.u32 4, %s20
      %p227 = scmp.lt.s32.totalorder %s19, 1
      %s228 = scalar_select %p227, %s19, 1
      %p229 = scmp.lt.s32.totalorder %s226, 63
      %s230 = scalar_select %p229, %s226, 63
      %s231 = smul.addr %s228, 64
      %s232 = sadd.s32 %s230, %s231
      %s233 = smul.addr %s232, 8
      %s234 = scalar_lea.vmem %s1, %s233
      %s235 = smul.u32 4, %s20
      %s236 = smul.u32 2, %s20
      %p237 = scmp.lt.s32.totalorder %s19, 1
      %s238 = scalar_select %p237, %s19, 1
      %p239 = scmp.lt.s32.totalorder %s236, 31
      %s240 = scalar_select %p239, %s236, 31
      %s241 = smul.addr %s238, 32
      %s242 = sadd.s32 %s240, %s241
      %s243 = smul.addr %s242, 8
      %s244 = scalar_lea.vmem %s2, %s243
      %s245 = smul.u32 2, %s20
      %p246 = scmp.lt.s32.totalorder %s19, 1
      %s247 = scalar_select %p246, %s19, 1
      %p248 = scmp.lt.s32.totalorder %s20, 15
      %s249 = scalar_select %p248, %s20, 15
      %s250 = smul.addr %s247, 16
      %s251 = sadd.s32 %s249, %s250
      %s252 = smul.addr %s251, 8
      %s253 = scalar_lea.vmem %s3, %s252
      %v254 = vld [vmem:[%s224] ss:$2 sm:$0xff]
      %s255 = scalar_lea.vmem %s224, 16
      %v256 = vld [vmem:[%s255] ss:$2 sm:$0xff]
      %s257 = scalar_lea.vmem %s224, 32
      %v258 = vld [vmem:[%s257] ss:$2 sm:$0xff]
      %s259 = scalar_lea.vmem %s224, 48
      %v260 = vld [vmem:[%s259] ss:$2 sm:$0xff]
      %s261 = scalar_lea.vmem %s224, 1
      %v262 = vld [vmem:[%s261] ss:$2 sm:$0xff]
      %s263 = scalar_lea.vmem %s224, 17
      %v264 = vld [vmem:[%s263] ss:$2 sm:$0xff]
      %s265 = scalar_lea.vmem %s224, 33
      %v266 = vld [vmem:[%s265] ss:$2 sm:$0xff]
      %s267 = scalar_lea.vmem %s224, 49
      %v268 = vld [vmem:[%s267] ss:$2 sm:$0xff]
      %v269 = vadd.f32 %v254, %v262
      %v270 = vadd.f32 %v256, %v264
      %v271 = vadd.f32 %v258, %v266
      %v272 = vadd.f32 %v260, %v268
      %v273 = vmul.f32 %v269, 0.5
      %v274 = vmul.f32 %v270, 0.5
      %v275 = vmul.f32 %v271, 0.5
      %v276 = vmul.f32 %v272, 0.5
      %vm277 = vcmask 64512
      %278 = vst.msk [vmem:[%s234] sm:$0xff] %vm277, %v273
      %279 = vst.msk [vmem:[%s234 + $0x8] sm:$0xff] %vm277, %v274
      %280 = vst.msk [vmem:[%s234 + $0x10] sm:$0xff] %vm277, %v275
      %281 = vst.msk [vmem:[%s234 + $0x18] sm:$0xff] %vm277, %v276
      %v282 = vld [vmem:[%s234] ss:$2 sm:$0xff]
      %s283 = scalar_lea.vmem %s234, 16
      %v284 = vld [vmem:[%s283] ss:$2 sm:$0xff]
      %s285 = scalar_lea.vmem %s234, 1
      %v286 = vld [vmem:[%s285] ss:$2 sm:$0xff]
      %s287 = scalar_lea.vmem %s234, 17
      %v288 = vld [vmem:[%s287] ss:$2 sm:$0xff]
      %v289 = vadd.f32 %v282, %v286
      %v290 = vadd.f32 %v284, %v288
      %v291 = vmul.f32 %v289, 0.5
      %v292 = vmul.f32 %v290, 0.5
      %293 = vst.msk [vmem:[%s244] sm:$0xff] %vm277, %v291
      %294 = vst.msk [vmem:[%s244 + $0x8] sm:$0xff] %vm277, %v292
      %v295 = vld [vmem:[%s244] ss:$2 sm:$0xff]
      %s296 = scalar_lea.vmem %s244, 1
      %v297 = vld [vmem:[%s296] ss:$2 sm:$0xff]
      %v298 = vadd.f32 %v295, %v297
      %v299 = vmul.f32 %v298, 0.5
      %300 = vst.msk [vmem:[%s253] sm:$0xff] %vm277, %v299
      %s301 = smul.u32 4, %s20
      %p302 = scmp.lt.s32.totalorder %s19, 1
      %s303 = scalar_select %p302, %s19, 1
      %p304 = scmp.lt.s32.totalorder %s301, 63
      %s305 = scalar_select %p304, %s301, 63
      %s306 = smul.addr %s303, 64
      %s307 = sadd.s32 %s305, %s306
      %s308 = smul.addr %s307, 8
      %s309 = scalar_lea.vmem %s1, %s308
      %s310 = smul.u32 2, %s20
      %p311 = scmp.lt.s32.totalorder %s19, 1
      %s312 = scalar_select %p311, %s19, 1
      %p313 = scmp.lt.s32.totalorder %s310, 31
      %s314 = scalar_select %p313, %s310, 31
      %s315 = smul.addr %s312, 32
      %s316 = sadd.s32 %s314, %s315
      %s317 = smul.addr %s316, 8
      %s318 = scalar_lea.vmem %s2, %s317
      %p319 = scmp.lt.s32.totalorder %s19, 1
      %s320 = scalar_select %p319, %s19, 1
      %p321 = scmp.lt.s32.totalorder %s20, 15
      %s322 = scalar_select %p321, %s20, 15
      %s323 = smul.addr %s320, 16
      %s324 = sadd.s32 %s322, %s323
      %s325 = smul.addr %s324, 8
      %s326 = scalar_lea.vmem %s3, %s325
      // Predicated region
      $region25: #{tpu_custom_call.1} parent=23 // pred_check
        %p327 = pneg %p75
      $region26: #{tpu_custom_call.1} parent=23 // pred_check_branch
        %329 = sbr.rel (%p327) target = $region28
      $region27: #{tpu_custom_call.1} parent=23 // pred_region
        %s330 = smul.u32 4, %s20
      $region28: #{tpu_custom_call.1} parent=23 // pred_fallthru
        _
      // Predicated region
      $region29: #{tpu_custom_call.1} parent=23 // pred_check
        %p331 = pneg %p103
      $region30: #{tpu_custom_call.1} parent=23 // pred_check_branch
        %333 = sbr.rel (%p331) target = $region32
      $region31: #{tpu_custom_call.1} parent=23 // pred_region
        %s334 = smul.u32 2, %s20
      $region32: #{tpu_custom_call.1} parent=23 // pred_fallthru
        _
      // Predicated region
      $region33: #{tpu_custom_call.1} parent=23 // pred_check
        %p335 = pneg %p131
      $region34: #{tpu_custom_call.1} parent=23 // pred_check_branch
        %337 = sbr.rel (%p335) target = $region36
      $region35: #{tpu_custom_call.1} parent=23 // pred_region
        _
      $region36: #{tpu_custom_call.1} parent=23 // pred_fallthru
        _
    $region24: #{tpu_custom_call.1} parent=5 // pred_fallthru
      _
    %p338 = scmp.le.s32.totalorder 2, %s10
    // Predicated region
    $region37: #{tpu_custom_call.1} parent=5 // pred_check
      %p339 = pneg %p338
    $region38: #{tpu_custom_call.1} parent=5 // pred_check_branch
      %341 = sbr.rel (%p339) target = $region40
    $region39: #{tpu_custom_call.1} parent=5 // pred_region
      %s342 = ssub.s32 %s10, 2
      // Predicated region
      $region41: #{tpu_custom_call.1} parent=39 // pred_check
        %p343 = pneg %p81
      $region42: #{tpu_custom_call.1} parent=39 // pred_check_branch
        %345 = sbr.rel (%p343) target = $region44
      $region43: #{tpu_custom_call.1} parent=39 // pred_region
        %s346 = smul.u32 4, %s22
        %p347 = scmp.lt.s32.totalorder %s21, 1
        %s348 = scalar_select %p347, %s21, 1
        %p349 = scmp.lt.s32.totalorder %s346, 63
        %s350 = scalar_select %p349, %s346, 63
        %s351 = smul.addr %s348, 64
        %s352 = sadd.s32 %s350, %s351
        %s353 = smul.addr %s352, 8
        %s354 = scalar_lea.vmem %s1, %s353
      $region44: #{tpu_custom_call.1} parent=39 // pred_fallthru
        _
      // Predicated region
      $region45: #{tpu_custom_call.1} parent=39 // pred_check
        %p355 = pneg %p109
      $region46: #{tpu_custom_call.1} parent=39 // pred_check_branch
        %357 = sbr.rel (%p355) target = $region48
      $region47: #{tpu_custom_call.1} parent=39 // pred_region
        %s358 = smul.u32 2, %s22
        %p359 = scmp.lt.s32.totalorder %s21, 1
        %s360 = scalar_select %p359, %s21, 1
        %p361 = scmp.lt.s32.totalorder %s358, 31
        %s362 = scalar_select %p361, %s358, 31
        %s363 = smul.addr %s360, 32
        %s364 = sadd.s32 %s362, %s363
        %s365 = smul.addr %s364, 8
        %s366 = scalar_lea.vmem %s2, %s365
      $region48: #{tpu_custom_call.1} parent=39 // pred_fallthru
        _
      // Predicated region
      $region49: #{tpu_custom_call.1} parent=39 // pred_check
        %p367 = pneg %p137
      $region50: #{tpu_custom_call.1} parent=39 // pred_check_branch
        %369 = sbr.rel (%p367) target = $region52
      $region51: #{tpu_custom_call.1} parent=39 // pred_region
        %p370 = scmp.lt.s32.totalorder %s21, 1
        %s371 = scalar_select %p370, %s21, 1
        %p372 = scmp.lt.s32.totalorder %s22, 15
        %s373 = scalar_select %p372, %s22, 15
        %s374 = smul.addr %s371, 16
        %s375 = sadd.s32 %s373, %s374
        %s376 = smul.addr %s375, 8
        %s377 = scalar_lea.vmem %s3, %s376
      $region52: #{tpu_custom_call.1} parent=39 // pred_fallthru
        _
    $region40: #{tpu_custom_call.1} parent=5 // pred_fallthru
      _
  $region6: #{tpu_custom_call.1} parent=0 // loop_footer
    %s14 = sadd.s32 1, %s10
  $region7: #{tpu_custom_call.1} parent=0 // loop_footer_branch
    %9 = sbr.rel target = $region3
  $region8: #{tpu_custom_call.1} parent=0 // loop_exit
    _

</llo_original>
